<compile_context>
chip_gen: v6e
topology: v6e:2x2x1
jax: 0.10.0
libtpu: 0.0.40
codegen_flags: <defaults>
</compile_context>

<pallas_src>
import functools

import jax
import jax.numpy as jnp
from jax.experimental import pallas as pl
from jax.experimental.pallas import tpu as pltpu


def _mlp_kernel(x_ref, w1_ref, b1_ref, w2_ref, b2_ref, out_ref):
    # fc1 (bf16 operands, f32 MXU accumulation)
    h = jnp.dot(x_ref[...], w1_ref[...], preferred_element_type=jnp.float32)
    # bias + ReLU in f32 on the VPU
    h = jnp.maximum(h + b1_ref[...], 0.0)
    # fc2 (cast activation back to bf16 for the MXU operand, f32 accumulation)
    o = jnp.dot(h.astype(jnp.bfloat16), w2_ref[...],
                preferred_element_type=jnp.float32)
    out_ref[...] = (o + b2_ref[...]).astype(out_ref.dtype)


def _round_up(n, m):
    return ((n + m - 1) // m) * m


@functools.partial(jax.jit, static_argnames=("tm",))
def side_effect_predictor(x, w1, b1, w2, b2, *, tm=256):
    """x: [B, input_dim]; w1: [input_dim, hidden]; b1: [hidden];
       w2: [hidden, num_classes]; b2: [num_classes] -> [B, num_classes] (f32)."""
    B, D = x.shape
    H = w1.shape[1]
    C = w2.shape[1]

    # --- lane-pad the narrow class dimension to a multiple of 128 -------------
    C_pad = _round_up(C, 128)
    w2_p = jnp.zeros((H, C_pad), dtype=w2.dtype).at[:, :C].set(w2)
    b2_p = jnp.zeros((1, C_pad), dtype=jnp.float32).at[:, :C].set(
        b2.astype(jnp.float32).reshape(1, -1))
    b1_2d = b1.astype(jnp.float32).reshape(1, -1)

    # --- batch tiling: single grid step when B is small, tiled otherwise ------
    if B <= tm:
        tm_eff, B_pad = B, B
        x_p = x
    else:
        tm_eff = tm
        B_pad = _round_up(B, tm_eff)
        x_p = jnp.zeros((B_pad, D), dtype=x.dtype).at[:B].set(x)
    grid = (B_pad // tm_eff,)

    # --- bf16 matmul operands (f32 accumulation inside the kernel) ------------
    x_bf = x_p.astype(jnp.bfloat16)
    w1_bf = w1.astype(jnp.bfloat16)
    w2_bf = w2_p.astype(jnp.bfloat16)

    flops = 2 * B_pad * (D * H + H * C_pad)
    bytes_accessed = (x_bf.size * 2 + w1_bf.size * 2 + w2_bf.size * 2
                      + b1_2d.size * 4 + b2_p.size * 4 + B_pad * C_pad * 4)

    out_padded = pl.pallas_call(
        _mlp_kernel,
        out_shape=jax.ShapeDtypeStruct((B_pad, C_pad), jnp.float32),
        grid_spec=pltpu.PrefetchScalarGridSpec(
            num_scalar_prefetch=0,
            grid=grid,
            in_specs=[
                pl.BlockSpec((tm_eff, D), lambda i: (i, 0)),   # x: tiled over batch
                pl.BlockSpec((D, H), lambda i: (0, 0)),        # w1: resident
                pl.BlockSpec((1, H), lambda i: (0, 0)),        # b1: resident
                pl.BlockSpec((H, C_pad), lambda i: (0, 0)),    # w2: resident
                pl.BlockSpec((1, C_pad), lambda i: (0, 0)),    # b2: resident
            ],
            out_specs=pl.BlockSpec((tm_eff, C_pad), lambda i: (i, 0)),
        ),
        compiler_params=pltpu.CompilerParams(
            dimension_semantics=("parallel",),
        ),
        cost_estimate=pl.CostEstimate(
            flops=flops, transcendentals=0, bytes_accessed=bytes_accessed),
    )(x_bf, w1_bf, b1_2d, w2_bf, b2_p)

    # strip batch padding and lane padding
    return out_padded[:B, :C]


if __name__ == "__main__":
    input_dim, hidden_dim, num_classes = 768, 512, 27
    batch = 8

    key = jax.random.PRNGKey(0)
    kx, kw1, kb1, kw2, kb2 = jax.random.split(key, 5)

    # Deterministic synthetic parameters (PyTorch stores W as [out, in];
    # we generate [in, out] directly, equivalent to passing W.T).
    x = jax.random.normal(kx, (batch, input_dim), dtype=jnp.float32)
    w1 = jax.random.normal(kw1, (input_dim, hidden_dim), dtype=jnp.float32) * 0.02
    b1 = jax.random.normal(kb1, (hidden_dim,), dtype=jnp.float32) * 0.02
    w2 = jax.random.normal(kw2, (hidden_dim, num_classes), dtype=jnp.float32) * 0.02
    b2 = jax.random.normal(kb2, (num_classes,), dtype=jnp.float32) * 0.02

    out = side_effect_predictor(x, w1, b1, w2, b2)
    out = jax.block_until_ready(out)

    # Pure-JAX f32 reference of the forward semantics (kernel uses bf16 matmul
    # operands with f32 accumulation, so compare with a bf16-appropriate tol).
    ref = jnp.maximum(x @ w1 + b1, 0.0) @ w2 + b2
    assert out.shape == (batch, num_classes)
    assert jnp.allclose(out, ref, atol=2e-2, rtol=2e-2), float(
        jnp.max(jnp.abs(out - ref)))

    print("KERNEL_OK")
</pallas_src>

<mosaic_0001>
module attributes {stable_mosaic.version = 11 : i64} {
  func.func @_mlp_kernel(%arg0: i32, %arg1: memref<8x768xbf16, #tpu.memory_space<vmem>>, %arg2: memref<768x512xbf16, #tpu.memory_space<vmem>>, %arg3: memref<1x512xf32, #tpu.memory_space<vmem>>, %arg4: memref<512x128xbf16, #tpu.memory_space<vmem>>, %arg5: memref<1x128xf32, #tpu.memory_space<vmem>>, %arg6: memref<8x128xf32, #tpu.memory_space<vmem>>) attributes {dimension_semantics = [#tpu.dimension_semantics<parallel>], iteration_bounds = array<i64: 1>, scalar_prefetch = 0 : i64, scratch_operands = 0 : i64, tpu.core_type = #tpu.core_type<tc>, window_params = [{transform_indices = @transform_0, window_bounds = array<i64: 8, 768>}, {pipeline_mode = #tpu.pipeline_mode<synchronous>, transform_indices = @transform_1, window_bounds = array<i64: 768, 512>}, {pipeline_mode = #tpu.pipeline_mode<synchronous>, transform_indices = @transform_2, window_bounds = array<i64: 1, 512>}, {pipeline_mode = #tpu.pipeline_mode<synchronous>, transform_indices = @transform_3, window_bounds = array<i64: 512, 128>}, {pipeline_mode = #tpu.pipeline_mode<synchronous>, transform_indices = @transform_4, window_bounds = array<i64: 1, 128>}, {transform_indices = @transform_5, window_bounds = array<i64: 8, 128>}]} {
    %c0 = arith.constant 0 : index
    %c0_0 = arith.constant 0 : index
    %0 = vector.load %arg1[%c0, %c0_0] : memref<8x768xbf16, #tpu.memory_space<vmem>>, vector<8x768xbf16>
    %c0_1 = arith.constant 0 : index
    %c0_2 = arith.constant 0 : index
    %1 = vector.load %arg2[%c0_1, %c0_2] : memref<768x512xbf16, #tpu.memory_space<vmem>>, vector<768x512xbf16>
    %cst = arith.constant dense<0.000000e+00> : vector<8x512xf32>
    %2 = tpu.matmul %0, %1, %cst {dimension_numbers = #tpu.dot_dimension_numbers<[1], [0], [0], [1], [0, 0, 1, 1], [], []>} : vector<8x768xbf16>, vector<768x512xbf16>, vector<8x512xf32> -> vector<8x512xf32>
    %c0_3 = arith.constant 0 : index
    %c0_4 = arith.constant 0 : index
    %3 = vector.load %arg3[%c0_3, %c0_4] : memref<1x512xf32, #tpu.memory_space<vmem>>, vector<1x512xf32>
    %4 = vector.broadcast %3 : vector<1x512xf32> to vector<8x512xf32>
    %5 = arith.addf %2, %4 : vector<8x512xf32>
    %cst_5 = arith.constant 0.000000e+00 : f32
    %6 = vector.broadcast %cst_5 : f32 to vector<8x512xf32>
    %7 = arith.maximumf %5, %6 : vector<8x512xf32>
    %8 = arith.truncf %7 : vector<8x512xf32> to vector<8x512xbf16>
    %c0_6 = arith.constant 0 : index
    %c0_7 = arith.constant 0 : index
    %9 = vector.load %arg4[%c0_6, %c0_7] : memref<512x128xbf16, #tpu.memory_space<vmem>>, vector<512x128xbf16>
    %cst_8 = arith.constant dense<0.000000e+00> : vector<8x128xf32>
    %10 = tpu.matmul %8, %9, %cst_8 {dimension_numbers = #tpu.dot_dimension_numbers<[1], [0], [0], [1], [0, 0, 1, 1], [], []>} : vector<8x512xbf16>, vector<512x128xbf16>, vector<8x128xf32> -> vector<8x128xf32>
    %c0_9 = arith.constant 0 : index
    %c0_10 = arith.constant 0 : index
    %11 = vector.load %arg5[%c0_9, %c0_10] : memref<1x128xf32, #tpu.memory_space<vmem>>, vector<1x128xf32>
    %12 = vector.broadcast %11 : vector<1x128xf32> to vector<8x128xf32>
    %13 = arith.addf %10, %12 : vector<8x128xf32>
    %c0_11 = arith.constant 0 : index
    %c0_12 = arith.constant 0 : index
    %14 = vector.load %arg6[%c0_11, %c0_12] : memref<8x128xf32, #tpu.memory_space<vmem>>, vector<8x128xf32>
    tpu.vector_store %arg6[%c0_11, %c0_12], %13 {strides = array<i32>} : memref<8x128xf32, #tpu.memory_space<vmem>>, vector<8x128xf32>,
    return
  }
  func.func @transform_0(%arg0: i32) -> (i32, i32) {
    %c0_i32 = arith.constant 0 : i32
    %c0_i32_0 = arith.constant 0 : i32
    return %arg0, %c0_i32 : i32, i32
  }
  func.func @transform_1(%arg0: i32) -> (i32, i32) {
    %c0_i32 = arith.constant 0 : i32
    %c0_i32_0 = arith.constant 0 : i32
    %c0_i32_1 = arith.constant 0 : i32
    return %c0_i32, %c0_i32_0 : i32, i32
  }
  func.func @transform_2(%arg0: i32) -> (i32, i32) {
    %c0_i32 = arith.constant 0 : i32
    %c0_i32_0 = arith.constant 0 : i32
    %c0_i32_1 = arith.constant 0 : i32
    return %c0_i32, %c0_i32_0 : i32, i32
  }
  func.func @transform_3(%arg0: i32) -> (i32, i32) {
    %c0_i32 = arith.constant 0 : i32
    %c0_i32_0 = arith.constant 0 : i32
    %c0_i32_1 = arith.constant 0 : i32
    return %c0_i32, %c0_i32_0 : i32, i32
  }
  func.func @transform_4(%arg0: i32) -> (i32, i32) {
    %c0_i32 = arith.constant 0 : i32
    %c0_i32_0 = arith.constant 0 : i32
    %c0_i32_1 = arith.constant 0 : i32
    return %c0_i32, %c0_i32_0 : i32, i32
  }
  func.func @transform_5(%arg0: i32) -> (i32, i32) {
    %c0_i32 = arith.constant 0 : i32
    %c0_i32_0 = arith.constant 0 : i32
    return %arg0, %c0_i32 : i32, i32
  }
}

</mosaic_0001>

<llo_original>
// kernel: side_effect_predictor.1
$region0: #{side_effect_predictor.1}
  #allocation0 [shape = 'u32[]', space=smem, size = 0x4, offset = 0x4, fixed_abs, tag = 'smem constant byte address 0x4 - core index']
  #allocation1 [shape = 'u32[144,128]{1,0:T(1,128)}', space=vmem, size = 0x12000, scoped, tag = 'internal scratch']
  %s0 = inlined_call_operand.vmem [shape: bf16[8,768], index: 0, kind: input, shape index: {}]
  %s1 = inlined_call_operand.vmem [shape: bf16[768,512], index: 1, kind: input, shape index: {}]
  %s2 = inlined_call_operand.vmem [shape: f32[1,512], index: 2, kind: input, shape index: {}]
  %s3 = inlined_call_operand.vmem [shape: bf16[512,128], index: 3, kind: input, shape index: {}]
  %s4 = inlined_call_operand.vmem [shape: f32[1,128], index: 4, kind: input, shape index: {}]
  %s5 = inlined_call_operand.hbm [shape: f32[8,128], index: 5, kind: output, shape index: {}]
  %s6 = sld [smem:[#allocation0]]
  $region30: #{side_effect_predictor.1} parent=0
    _
  %s8 = ssub.s32 1, %s6
  %s9 = scalar_select 0, %s8, %s6
  $region1: #{side_effect_predictor.1} parent=0
    #allocation2 [shape = 'u8[4096]{0}', space=vmem, size = 0x1000, scoped, tag = 'output window, operand 0, single buffered']
    #allocation3 [shape = 's32[1]{0}', space=sflag, size = 0x4, scoped, tag = 'scoped memory for side_effect_predictor.1']
    %10 = vsyncpa [#allocation3], 0
    // Predicated region
    $region2: #{side_effect_predictor.1} parent=1 // pred_check
      _
    $region3: #{side_effect_predictor.1} parent=1 // pred_check_branch
      %12 = sbr.rel (0) target = $region5
    $region4: #{side_effect_predictor.1} parent=1 // pred_region
      _
    $region5: #{side_effect_predictor.1} parent=1 // pred_fallthru
      _
    // Predicated region
    $region6: #{side_effect_predictor.1} parent=1 // pred_check
      _
    $region7: #{side_effect_predictor.1} parent=1 // pred_check_branch
      %14 = sbr.rel (0) target = $region9
    $region8: #{side_effect_predictor.1} parent=1 // pred_region
      _
    $region9: #{side_effect_predictor.1} parent=1 // pred_fallthru
      _
    // Predicated region
    $region10: #{side_effect_predictor.1} parent=1 // pred_check
      _
    $region11: #{side_effect_predictor.1} parent=1 // pred_check_branch
      %16 = sbr.rel (0) target = $region13
    $region12: #{side_effect_predictor.1} parent=1 // pred_region
      _
    $region13: #{side_effect_predictor.1} parent=1 // pred_fallthru
      _
    // Predicated region
    $region14: #{side_effect_predictor.1} parent=1 // pred_check
      _
    $region15: #{side_effect_predictor.1} parent=1 // pred_check_branch
      %18 = sbr.rel (0) target = $region17
    $region16: #{side_effect_predictor.1} parent=1 // pred_region
      _
    $region17: #{side_effect_predictor.1} parent=1 // pred_fallthru
      _
    // Predicated region
    $region18: #{side_effect_predictor.1} parent=1 // pred_check
      _
    $region19: #{side_effect_predictor.1} parent=1 // pred_check_branch
      %20 = sbr.rel (0) target = $region21
    $region20: #{side_effect_predictor.1} parent=1 // pred_region
      _
    $region21: #{side_effect_predictor.1} parent=1 // pred_fallthru
      _
    %v22 = vld [vmem:[%s0] sm:$0xff]
    %v23 = vld [vmem:[%s0 + $0x8] sm:$0xff]
    %v24 = vld [vmem:[%s0 + $0x10] sm:$0xff]
    %v25 = vld [vmem:[%s1] sm:$0xff]
    %v26 = vld [vmem:[%s1 + $0x8] sm:$0xff]
    %v27 = vld [vmem:[%s1 + $0x10] sm:$0xff]
    %v28 = vld [vmem:[%s1 + $0x18] sm:$0xff]
    %v29 = vld [vmem:[%s1 + $0x20] sm:$0xff]
    %v30 = vld [vmem:[%s1 + $0x28] sm:$0xff]
    %v31 = vld [vmem:[%s1 + $0x30] sm:$0xff]
    %v32 = vld [vmem:[%s1 + $0x38] sm:$0xff]
    %v33 = vld [vmem:[%s1 + $0x40] sm:$0xff]
    %v34 = vld [vmem:[%s1 + $0x48] sm:$0xff]
    %v35 = vld [vmem:[%s1 + $0x50] sm:$0xff]
    %v36 = vld [vmem:[%s1 + $0x58] sm:$0xff]
    %v37 = vld [vmem:[%s1 + $0x60] sm:$0xff]
    %v38 = vld [vmem:[%s1 + $0x68] sm:$0xff]
    %v39 = vld [vmem:[%s1 + $0x70] sm:$0xff]
    %v40 = vld [vmem:[%s1 + $0x78] sm:$0xff]
    %v41 = vld [vmem:[%s1 + $0x80] sm:$0xff]
    %v42 = vld [vmem:[%s1 + $0x88] sm:$0xff]
    %v43 = vld [vmem:[%s1 + $0x90] sm:$0xff]
    %v44 = vld [vmem:[%s1 + $0x98] sm:$0xff]
    %v45 = vld [vmem:[%s1 + $0xa0] sm:$0xff]
    %v46 = vld [vmem:[%s1 + $0xa8] sm:$0xff]
    %v47 = vld [vmem:[%s1 + $0xb0] sm:$0xff]
    %v48 = vld [vmem:[%s1 + $0xb8] sm:$0xff]
    %v49 = vld [vmem:[%s1 + $0xc0] sm:$0xff]
    %v50 = vld [vmem:[%s1 + $0xc8] sm:$0xff]
    %v51 = vld [vmem:[%s1 + $0xd0] sm:$0xff]
    %v52 = vld [vmem:[%s1 + $0xd8] sm:$0xff]
    %v53 = vld [vmem:[%s1 + $0xe0] sm:$0xff]
    %v54 = vld [vmem:[%s1 + $0xe8] sm:$0xff]
    %v55 = vld [vmem:[%s1 + $0xf0] sm:$0xff]
    %v56 = vld [vmem:[%s1 + $0xf8] sm:$0xff]
    %v57 = vld [vmem:[%s1 + $0x100] sm:$0xff]
    %v58 = vld [vmem:[%s1 + $0x108] sm:$0xff]
    %v59 = vld [vmem:[%s1 + $0x110] sm:$0xff]
    %v60 = vld [vmem:[%s1 + $0x118] sm:$0xff]
    %v61 = vld [vmem:[%s1 + $0x120] sm:$0xff]
    %v62 = vld [vmem:[%s1 + $0x128] sm:$0xff]
    %v63 = vld [vmem:[%s1 + $0x130] sm:$0xff]
    %v64 = vld [vmem:[%s1 + $0x138] sm:$0xff]
    %v65 = vld [vmem:[%s1 + $0x140] sm:$0xff]
    %v66 = vld [vmem:[%s1 + $0x148] sm:$0xff]
    %v67 = vld [vmem:[%s1 + $0x150] sm:$0xff]
    %v68 = vld [vmem:[%s1 + $0x158] sm:$0xff]
    %v69 = vld [vmem:[%s1 + $0x160] sm:$0xff]
    %v70 = vld [vmem:[%s1 + $0x168] sm:$0xff]
    %v71 = vld [vmem:[%s1 + $0x170] sm:$0xff]
    %v72 = vld [vmem:[%s1 + $0x178] sm:$0xff]
    %v73 = vld [vmem:[%s1 + $0x180] sm:$0xff]
    %v74 = vld [vmem:[%s1 + $0x188] sm:$0xff]
    %v75 = vld [vmem:[%s1 + $0x190] sm:$0xff]
    %v76 = vld [vmem:[%s1 + $0x198] sm:$0xff]
    %v77 = vld [vmem:[%s1 + $0x1a0] sm:$0xff]
    %v78 = vld [vmem:[%s1 + $0x1a8] sm:$0xff]
    %v79 = vld [vmem:[%s1 + $0x1b0] sm:$0xff]
    %v80 = vld [vmem:[%s1 + $0x1b8] sm:$0xff]
    %v81 = vld [vmem:[%s1 + $0x1c0] sm:$0xff]
    %v82 = vld [vmem:[%s1 + $0x1c8] sm:$0xff]
    %v83 = vld [vmem:[%s1 + $0x1d0] sm:$0xff]
    %v84 = vld [vmem:[%s1 + $0x1d8] sm:$0xff]
    %v85 = vld [vmem:[%s1 + $0x1e0] sm:$0xff]
    %v86 = vld [vmem:[%s1 + $0x1e8] sm:$0xff]
    %v87 = vld [vmem:[%s1 + $0x1f0] sm:$0xff]
    %v88 = vld [vmem:[%s1 + $0x1f8] sm:$0xff]
    %v89 = vld [vmem:[%s1 + $0x200] sm:$0xff]
    %v90 = vld [vmem:[%s1 + $0x208] sm:$0xff]
    %v91 = vld [vmem:[%s1 + $0x210] sm:$0xff]
    %v92 = vld [vmem:[%s1 + $0x218] sm:$0xff]
    %v93 = vld [vmem:[%s1 + $0x220] sm:$0xff]
    %v94 = vld [vmem:[%s1 + $0x228] sm:$0xff]
    %v95 = vld [vmem:[%s1 + $0x230] sm:$0xff]
    %v96 = vld [vmem:[%s1 + $0x238] sm:$0xff]
    %v97 = vld [vmem:[%s1 + $0x240] sm:$0xff]
    %v98 = vld [vmem:[%s1 + $0x248] sm:$0xff]
    %v99 = vld [vmem:[%s1 + $0x250] sm:$0xff]
    %v100 = vld [vmem:[%s1 + $0x258] sm:$0xff]
    %v101 = vld [vmem:[%s1 + $0x260] sm:$0xff]
    %v102 = vld [vmem:[%s1 + $0x268] sm:$0xff]
    %v103 = vld [vmem:[%s1 + $0x270] sm:$0xff]
    %v104 = vld [vmem:[%s1 + $0x278] sm:$0xff]
    %v105 = vld [vmem:[%s1 + $0x280] sm:$0xff]
    %v106 = vld [vmem:[%s1 + $0x288] sm:$0xff]
    %v107 = vld [vmem:[%s1 + $0x290] sm:$0xff]
    %v108 = vld [vmem:[%s1 + $0x298] sm:$0xff]
    %v109 = vld [vmem:[%s1 + $0x2a0] sm:$0xff]
    %v110 = vld [vmem:[%s1 + $0x2a8] sm:$0xff]
    %v111 = vld [vmem:[%s1 + $0x2b0] sm:$0xff]
    %v112 = vld [vmem:[%s1 + $0x2b8] sm:$0xff]
    %v113 = vld [vmem:[%s1 + $0x2c0] sm:$0xff]
    %v114 = vld [vmem:[%s1 + $0x2c8] sm:$0xff]
    %v115 = vld [vmem:[%s1 + $0x2d0] sm:$0xff]
    %v116 = vld [vmem:[%s1 + $0x2d8] sm:$0xff]
    %v117 = vld [vmem:[%s1 + $0x2e0] sm:$0xff]
    %v118 = vld [vmem:[%s1 + $0x2e8] sm:$0xff]
    %v119 = vld [vmem:[%s1 + $0x2f0] sm:$0xff]
    %v120 = vld [vmem:[%s1 + $0x2f8] sm:$0xff]
    %v121 = vld [vmem:[%s1 + $0x300] sm:$0xff]
    %v122 = vld [vmem:[%s1 + $0x308] sm:$0xff]
    %v123 = vld [vmem:[%s1 + $0x310] sm:$0xff]
    %v124 = vld [vmem:[%s1 + $0x318] sm:$0xff]
    %v125 = vld [vmem:[%s1 + $0x320] sm:$0xff]
    %v126 = vld [vmem:[%s1 + $0x328] sm:$0xff]
    %v127 = vld [vmem:[%s1 + $0x330] sm:$0xff]
    %v128 = vld [vmem:[%s1 + $0x338] sm:$0xff]
    %v129 = vld [vmem:[%s1 + $0x340] sm:$0xff]
    %v130 = vld [vmem:[%s1 + $0x348] sm:$0xff]
    %v131 = vld [vmem:[%s1 + $0x350] sm:$0xff]
    %v132 = vld [vmem:[%s1 + $0x358] sm:$0xff]
    %v133 = vld [vmem:[%s1 + $0x360] sm:$0xff]
    %v134 = vld [vmem:[%s1 + $0x368] sm:$0xff]
    %v135 = vld [vmem:[%s1 + $0x370] sm:$0xff]
    %v136 = vld [vmem:[%s1 + $0x378] sm:$0xff]
    %v137 = vld [vmem:[%s1 + $0x380] sm:$0xff]
    %v138 = vld [vmem:[%s1 + $0x388] sm:$0xff]
    %v139 = vld [vmem:[%s1 + $0x390] sm:$0xff]
    %v140 = vld [vmem:[%s1 + $0x398] sm:$0xff]
    %v141 = vld [vmem:[%s1 + $0x3a0] sm:$0xff]
    %v142 = vld [vmem:[%s1 + $0x3a8] sm:$0xff]
    %v143 = vld [vmem:[%s1 + $0x3b0] sm:$0xff]
    %v144 = vld [vmem:[%s1 + $0x3b8] sm:$0xff]
    %v145 = vld [vmem:[%s1 + $0x3c0] sm:$0xff]
    %v146 = vld [vmem:[%s1 + $0x3c8] sm:$0xff]
    %v147 = vld [vmem:[%s1 + $0x3d0] sm:$0xff]
    %v148 = vld [vmem:[%s1 + $0x3d8] sm:$0xff]
    %v149 = vld [vmem:[%s1 + $0x3e0] sm:$0xff]
    %v150 = vld [vmem:[%s1 + $0x3e8] sm:$0xff]
    %v151 = vld [vmem:[%s1 + $0x3f0] sm:$0xff]
    %v152 = vld [vmem:[%s1 + $0x3f8] sm:$0xff]
    %v153 = vld [vmem:[%s1 + $0x400] sm:$0xff]
    %v154 = vld [vmem:[%s1 + $0x408] sm:$0xff]
    %v155 = vld [vmem:[%s1 + $0x410] sm:$0xff]
    %v156 = vld [vmem:[%s1 + $0x418] sm:$0xff]
    %v157 = vld [vmem:[%s1 + $0x420] sm:$0xff]
    %v158 = vld [vmem:[%s1 + $0x428] sm:$0xff]
    %v159 = vld [vmem:[%s1 + $0x430] sm:$0xff]
    %v160 = vld [vmem:[%s1 + $0x438] sm:$0xff]
    %v161 = vld [vmem:[%s1 + $0x440] sm:$0xff]
    %v162 = vld [vmem:[%s1 + $0x448] sm:$0xff]
    %v163 = vld [vmem:[%s1 + $0x450] sm:$0xff]
    %v164 = vld [vmem:[%s1 + $0x458] sm:$0xff]
    %v165 = vld [vmem:[%s1 + $0x460] sm:$0xff]
    %v166 = vld [vmem:[%s1 + $0x468] sm:$0xff]
    %v167 = vld [vmem:[%s1 + $0x470] sm:$0xff]
    %v168 = vld [vmem:[%s1 + $0x478] sm:$0xff]
    %v169 = vld [vmem:[%s1 + $0x480] sm:$0xff]
    %v170 = vld [vmem:[%s1 + $0x488] sm:$0xff]
    %v171 = vld [vmem:[%s1 + $0x490] sm:$0xff]
    %v172 = vld [vmem:[%s1 + $0x498] sm:$0xff]
    %v173 = vld [vmem:[%s1 + $0x4a0] sm:$0xff]
    %v174 = vld [vmem:[%s1 + $0x4a8] sm:$0xff]
    %v175 = vld [vmem:[%s1 + $0x4b0] sm:$0xff]
    %v176 = vld [vmem:[%s1 + $0x4b8] sm:$0xff]
    %v177 = vld [vmem:[%s1 + $0x4c0] sm:$0xff]
    %v178 = vld [vmem:[%s1 + $0x4c8] sm:$0xff]
    %v179 = vld [vmem:[%s1 + $0x4d0] sm:$0xff]
    %v180 = vld [vmem:[%s1 + $0x4d8] sm:$0xff]
    %v181 = vld [vmem:[%s1 + $0x4e0] sm:$0xff]
    %v182 = vld [vmem:[%s1 + $0x4e8] sm:$0xff]
    %v183 = vld [vmem:[%s1 + $0x4f0] sm:$0xff]
    %v184 = vld [vmem:[%s1 + $0x4f8] sm:$0xff]
    %v185 = vld [vmem:[%s1 + $0x500] sm:$0xff]
    %v186 = vld [vmem:[%s1 + $0x508] sm:$0xff]
    %v187 = vld [vmem:[%s1 + $0x510] sm:$0xff]
    %v188 = vld [vmem:[%s1 + $0x518] sm:$0xff]
    %v189 = vld [vmem:[%s1 + $0x520] sm:$0xff]
    %v190 = vld [vmem:[%s1 + $0x528] sm:$0xff]
    %v191 = vld [vmem:[%s1 + $0x530] sm:$0xff]
    %v192 = vld [vmem:[%s1 + $0x538] sm:$0xff]
    %v193 = vld [vmem:[%s1 + $0x540] sm:$0xff]
    %v194 = vld [vmem:[%s1 + $0x548] sm:$0xff]
    %v195 = vld [vmem:[%s1 + $0x550] sm:$0xff]
    %v196 = vld [vmem:[%s1 + $0x558] sm:$0xff]
    %v197 = vld [vmem:[%s1 + $0x560] sm:$0xff]
    %v198 = vld [vmem:[%s1 + $0x568] sm:$0xff]
    %v199 = vld [vmem:[%s1 + $0x570] sm:$0xff]
    %v200 = vld [vmem:[%s1 + $0x578] sm:$0xff]
    %v201 = vld [vmem:[%s1 + $0x580] sm:$0xff]
    %v202 = vld [vmem:[%s1 + $0x588] sm:$0xff]
    %v203 = vld [vmem:[%s1 + $0x590] sm:$0xff]
    %v204 = vld [vmem:[%s1 + $0x598] sm:$0xff]
    %v205 = vld [vmem:[%s1 + $0x5a0] sm:$0xff]
    %v206 = vld [vmem:[%s1 + $0x5a8] sm:$0xff]
    %v207 = vld [vmem:[%s1 + $0x5b0] sm:$0xff]
    %v208 = vld [vmem:[%s1 + $0x5b8] sm:$0xff]
    %v209 = vld [vmem:[%s1 + $0x5c0] sm:$0xff]
    %v210 = vld [vmem:[%s1 + $0x5c8] sm:$0xff]
    %v211 = vld [vmem:[%s1 + $0x5d0] sm:$0xff]
    %v212 = vld [vmem:[%s1 + $0x5d8] sm:$0xff]
    %v213 = vld [vmem:[%s1 + $0x5e0] sm:$0xff]
    %v214 = vld [vmem:[%s1 + $0x5e8] sm:$0xff]
    %v215 = vld [vmem:[%s1 + $0x5f0] sm:$0xff]
    %v216 = vld [vmem:[%s1 + $0x5f8] sm:$0xff]
    %v217 = vld [vmem:[%s2] sm:$0xf]
    %v219 = vlaneseq
    %v220 = vshrl.u32 %v219, 7
    %v221 = vsub.s32 0, %v220
    %v222 = vrot.slane %v217, %v221
    %v223 = vlaneseq
    %v224 = vshrl.u32 %v223, 7
    %v225 = vsub.s32 1, %v224
    %v226 = vrot.slane %v217, %v225
    %v227 = vlaneseq
    %v228 = vshrl.u32 %v227, 7
    %v229 = vsub.s32 2, %v228
    %v230 = vrot.slane %v217, %v229
    %v231 = vlaneseq
    %v232 = vshrl.u32 %v231, 7
    %v233 = vsub.s32 3, %v232
    %v234 = vrot.slane %v217, %v233
    %v242 = vunpack.c.l.b16 %v22
    %v243 = vunpack.c.h.b16 %v22
    %v244 = vunpack.c.l.b16 %v23
    %v245 = vunpack.c.h.b16 %v23
    %v246 = vunpack.c.l.b16 %v24
    %v247 = vunpack.c.h.b16 %v24
    %v248 = vpack.c.b16 %v242, %v242
    %v249 = vpack.c.b16 %v243, %v243
    %v250 = vpack.c.b16 %v244, %v244
    %v251 = vpack.c.b16 %v245, %v245
    %v252 = vpack.c.b16 %v246, %v246
    %v253 = vpack.c.b16 %v247, %v247
    %v452 = vunpack.c.l.b16 %v25
    %v453 = vunpack.c.h.b16 %v25
    %v454 = vunpack.c.l.b16 %v26
    %v455 = vunpack.c.h.b16 %v26
    %v456 = vunpack.c.l.b16 %v27
    %v457 = vunpack.c.h.b16 %v27
    %v458 = vunpack.c.l.b16 %v28
    %v459 = vunpack.c.h.b16 %v28
    %v460 = vunpack.c.l.b16 %v29
    %v461 = vunpack.c.h.b16 %v29
    %v462 = vunpack.c.l.b16 %v30
    %v463 = vunpack.c.h.b16 %v30
    %v464 = vunpack.c.l.b16 %v31
    %v465 = vunpack.c.h.b16 %v31
    %v466 = vunpack.c.l.b16 %v32
    %v467 = vunpack.c.h.b16 %v32
    %v468 = vunpack.c.l.b16 %v33
    %v469 = vunpack.c.h.b16 %v33
    %v470 = vunpack.c.l.b16 %v34
    %v471 = vunpack.c.h.b16 %v34
    %v472 = vunpack.c.l.b16 %v35
    %v473 = vunpack.c.h.b16 %v35
    %v474 = vunpack.c.l.b16 %v36
    %v475 = vunpack.c.h.b16 %v36
    %v476 = vunpack.c.l.b16 %v37
    %v477 = vunpack.c.h.b16 %v37
    %v478 = vunpack.c.l.b16 %v38
    %v479 = vunpack.c.h.b16 %v38
    %v480 = vunpack.c.l.b16 %v39
    %v481 = vunpack.c.h.b16 %v39
    %v482 = vunpack.c.l.b16 %v40
    %v483 = vunpack.c.h.b16 %v40
    %v484 = vunpack.c.l.b16 %v41
    %v485 = vunpack.c.h.b16 %v41
    %v486 = vunpack.c.l.b16 %v42
    %v487 = vunpack.c.h.b16 %v42
    %v488 = vunpack.c.l.b16 %v43
    %v489 = vunpack.c.h.b16 %v43
    %v490 = vunpack.c.l.b16 %v44
    %v491 = vunpack.c.h.b16 %v44
    %v492 = vunpack.c.l.b16 %v45
    %v493 = vunpack.c.h.b16 %v45
    %v494 = vunpack.c.l.b16 %v46
    %v495 = vunpack.c.h.b16 %v46
    %v496 = vunpack.c.l.b16 %v47
    %v497 = vunpack.c.h.b16 %v47
    %v498 = vunpack.c.l.b16 %v48
    %v499 = vunpack.c.h.b16 %v48
    %v500 = vunpack.c.l.b16 %v49
    %v501 = vunpack.c.h.b16 %v49
    %v502 = vunpack.c.l.b16 %v50
    %v503 = vunpack.c.h.b16 %v50
    %v504 = vunpack.c.l.b16 %v51
    %v505 = vunpack.c.h.b16 %v51
    %v506 = vunpack.c.l.b16 %v52
    %v507 = vunpack.c.h.b16 %v52
    %v508 = vunpack.c.l.b16 %v53
    %v509 = vunpack.c.h.b16 %v53
    %v510 = vunpack.c.l.b16 %v54
    %v511 = vunpack.c.h.b16 %v54
    %v512 = vunpack.c.l.b16 %v55
    %v513 = vunpack.c.h.b16 %v55
    %v514 = vunpack.c.l.b16 %v56
    %v515 = vunpack.c.h.b16 %v56
    %v516 = vunpack.c.l.b16 %v57
    %v517 = vunpack.c.h.b16 %v57
    %v518 = vunpack.c.l.b16 %v58
    %v519 = vunpack.c.h.b16 %v58
    %v520 = vunpack.c.l.b16 %v59
    %v521 = vunpack.c.h.b16 %v59
    %v522 = vunpack.c.l.b16 %v60
    %v523 = vunpack.c.h.b16 %v60
    %v524 = vunpack.c.l.b16 %v61
    %v525 = vunpack.c.h.b16 %v61
    %v526 = vunpack.c.l.b16 %v62
    %v527 = vunpack.c.h.b16 %v62
    %v528 = vunpack.c.l.b16 %v63
    %v529 = vunpack.c.h.b16 %v63
    %v530 = vunpack.c.l.b16 %v64
    %v531 = vunpack.c.h.b16 %v64
    %v532 = vunpack.c.l.b16 %v65
    %v533 = vunpack.c.h.b16 %v65
    %v534 = vunpack.c.l.b16 %v66
    %v535 = vunpack.c.h.b16 %v66
    %v536 = vunpack.c.l.b16 %v67
    %v537 = vunpack.c.h.b16 %v67
    %v538 = vunpack.c.l.b16 %v68
    %v539 = vunpack.c.h.b16 %v68
    %v540 = vunpack.c.l.b16 %v69
    %v541 = vunpack.c.h.b16 %v69
    %v542 = vunpack.c.l.b16 %v70
    %v543 = vunpack.c.h.b16 %v70
    %v544 = vunpack.c.l.b16 %v71
    %v545 = vunpack.c.h.b16 %v71
    %v546 = vunpack.c.l.b16 %v72
    %v547 = vunpack.c.h.b16 %v72
    %v548 = vunpack.c.l.b16 %v73
    %v549 = vunpack.c.h.b16 %v73
    %v550 = vunpack.c.l.b16 %v74
    %v551 = vunpack.c.h.b16 %v74
    %v552 = vunpack.c.l.b16 %v75
    %v553 = vunpack.c.h.b16 %v75
    %v554 = vunpack.c.l.b16 %v76
    %v555 = vunpack.c.h.b16 %v76
    %v556 = vunpack.c.l.b16 %v77
    %v557 = vunpack.c.h.b16 %v77
    %v558 = vunpack.c.l.b16 %v78
    %v559 = vunpack.c.h.b16 %v78
    %v560 = vunpack.c.l.b16 %v79
    %v561 = vunpack.c.h.b16 %v79
    %v562 = vunpack.c.l.b16 %v80
    %v563 = vunpack.c.h.b16 %v80
    %v564 = vunpack.c.l.b16 %v81
    %v565 = vunpack.c.h.b16 %v81
    %v566 = vunpack.c.l.b16 %v82
    %v567 = vunpack.c.h.b16 %v82
    %v568 = vunpack.c.l.b16 %v83
    %v569 = vunpack.c.h.b16 %v83
    %v570 = vunpack.c.l.b16 %v84
    %v571 = vunpack.c.h.b16 %v84
    %v572 = vunpack.c.l.b16 %v85
    %v573 = vunpack.c.h.b16 %v85
    %v574 = vunpack.c.l.b16 %v86
    %v575 = vunpack.c.h.b16 %v86
    %v576 = vunpack.c.l.b16 %v87
    %v577 = vunpack.c.h.b16 %v87
    %v578 = vunpack.c.l.b16 %v88
    %v579 = vunpack.c.h.b16 %v88
    %v580 = vunpack.c.l.b16 %v89
    %v581 = vunpack.c.h.b16 %v89
    %v582 = vunpack.c.l.b16 %v90
    %v583 = vunpack.c.h.b16 %v90
    %v584 = vunpack.c.l.b16 %v91
    %v585 = vunpack.c.h.b16 %v91
    %v586 = vunpack.c.l.b16 %v92
    %v587 = vunpack.c.h.b16 %v92
    %v588 = vunpack.c.l.b16 %v93
    %v589 = vunpack.c.h.b16 %v93
    %v590 = vunpack.c.l.b16 %v94
    %v591 = vunpack.c.h.b16 %v94
    %v592 = vunpack.c.l.b16 %v95
    %v593 = vunpack.c.h.b16 %v95
    %v594 = vunpack.c.l.b16 %v96
    %v595 = vunpack.c.h.b16 %v96
    %v596 = vunpack.c.l.b16 %v97
    %v597 = vunpack.c.h.b16 %v97
    %v598 = vunpack.c.l.b16 %v98
    %v599 = vunpack.c.h.b16 %v98
    %v600 = vunpack.c.l.b16 %v99
    %v601 = vunpack.c.h.b16 %v99
    %v602 = vunpack.c.l.b16 %v100
    %v603 = vunpack.c.h.b16 %v100
    %v604 = vunpack.c.l.b16 %v101
    %v605 = vunpack.c.h.b16 %v101
    %v606 = vunpack.c.l.b16 %v102
    %v607 = vunpack.c.h.b16 %v102
    %v608 = vunpack.c.l.b16 %v103
    %v609 = vunpack.c.h.b16 %v103
    %v610 = vunpack.c.l.b16 %v104
    %v611 = vunpack.c.h.b16 %v104
    %v612 = vunpack.c.l.b16 %v105
    %v613 = vunpack.c.h.b16 %v105
    %v614 = vunpack.c.l.b16 %v106
    %v615 = vunpack.c.h.b16 %v106
    %v616 = vunpack.c.l.b16 %v107
    %v617 = vunpack.c.h.b16 %v107
    %v618 = vunpack.c.l.b16 %v108
    %v619 = vunpack.c.h.b16 %v108
    %v620 = vunpack.c.l.b16 %v109
    %v621 = vunpack.c.h.b16 %v109
    %v622 = vunpack.c.l.b16 %v110
    %v623 = vunpack.c.h.b16 %v110
    %v624 = vunpack.c.l.b16 %v111
    %v625 = vunpack.c.h.b16 %v111
    %v626 = vunpack.c.l.b16 %v112
    %v627 = vunpack.c.h.b16 %v112
    %v628 = vunpack.c.l.b16 %v113
    %v629 = vunpack.c.h.b16 %v113
    %v630 = vunpack.c.l.b16 %v114
    %v631 = vunpack.c.h.b16 %v114
    %v632 = vunpack.c.l.b16 %v115
    %v633 = vunpack.c.h.b16 %v115
    %v634 = vunpack.c.l.b16 %v116
    %v635 = vunpack.c.h.b16 %v116
    %v636 = vunpack.c.l.b16 %v117
    %v637 = vunpack.c.h.b16 %v117
    %v638 = vunpack.c.l.b16 %v118
    %v639 = vunpack.c.h.b16 %v118
    %v640 = vunpack.c.l.b16 %v119
    %v641 = vunpack.c.h.b16 %v119
    %v642 = vunpack.c.l.b16 %v120
    %v643 = vunpack.c.h.b16 %v120
    %v644 = vunpack.c.l.b16 %v121
    %v645 = vunpack.c.h.b16 %v121
    %v646 = vunpack.c.l.b16 %v122
    %v647 = vunpack.c.h.b16 %v122
    %v648 = vunpack.c.l.b16 %v123
    %v649 = vunpack.c.h.b16 %v123
    %v650 = vunpack.c.l.b16 %v124
    %v651 = vunpack.c.h.b16 %v124
    %v652 = vunpack.c.l.b16 %v125
    %v653 = vunpack.c.h.b16 %v125
    %v654 = vunpack.c.l.b16 %v126
    %v655 = vunpack.c.h.b16 %v126
    %v656 = vunpack.c.l.b16 %v127
    %v657 = vunpack.c.h.b16 %v127
    %v658 = vunpack.c.l.b16 %v128
    %v659 = vunpack.c.h.b16 %v128
    %v660 = vunpack.c.l.b16 %v129
    %v661 = vunpack.c.h.b16 %v129
    %v662 = vunpack.c.l.b16 %v130
    %v663 = vunpack.c.h.b16 %v130
    %v664 = vunpack.c.l.b16 %v131
    %v665 = vunpack.c.h.b16 %v131
    %v666 = vunpack.c.l.b16 %v132
    %v667 = vunpack.c.h.b16 %v132
    %v668 = vunpack.c.l.b16 %v133
    %v669 = vunpack.c.h.b16 %v133
    %v670 = vunpack.c.l.b16 %v134
    %v671 = vunpack.c.h.b16 %v134
    %v672 = vunpack.c.l.b16 %v135
    %v673 = vunpack.c.h.b16 %v135
    %v674 = vunpack.c.l.b16 %v136
    %v675 = vunpack.c.h.b16 %v136
    %v676 = vunpack.c.l.b16 %v137
    %v677 = vunpack.c.h.b16 %v137
    %v678 = vunpack.c.l.b16 %v138
    %v679 = vunpack.c.h.b16 %v138
    %v680 = vunpack.c.l.b16 %v139
    %v681 = vunpack.c.h.b16 %v139
    %v682 = vunpack.c.l.b16 %v140
    %v683 = vunpack.c.h.b16 %v140
    %v684 = vunpack.c.l.b16 %v141
    %v685 = vunpack.c.h.b16 %v141
    %v686 = vunpack.c.l.b16 %v142
    %v687 = vunpack.c.h.b16 %v142
    %v688 = vunpack.c.l.b16 %v143
    %v689 = vunpack.c.h.b16 %v143
    %v690 = vunpack.c.l.b16 %v144
    %v691 = vunpack.c.h.b16 %v144
    %v692 = vunpack.c.l.b16 %v145
    %v693 = vunpack.c.h.b16 %v145
    %v694 = vunpack.c.l.b16 %v146
    %v695 = vunpack.c.h.b16 %v146
    %v696 = vunpack.c.l.b16 %v147
    %v697 = vunpack.c.h.b16 %v147
    %v698 = vunpack.c.l.b16 %v148
    %v699 = vunpack.c.h.b16 %v148
    %v700 = vunpack.c.l.b16 %v149
    %v701 = vunpack.c.h.b16 %v149
    %v702 = vunpack.c.l.b16 %v150
    %v703 = vunpack.c.h.b16 %v150
    %v704 = vunpack.c.l.b16 %v151
    %v705 = vunpack.c.h.b16 %v151
    %v706 = vunpack.c.l.b16 %v152
    %v707 = vunpack.c.h.b16 %v152
    %v708 = vunpack.c.l.b16 %v153
    %v709 = vunpack.c.h.b16 %v153
    %v710 = vunpack.c.l.b16 %v154
    %v711 = vunpack.c.h.b16 %v154
    %v712 = vunpack.c.l.b16 %v155
    %v713 = vunpack.c.h.b16 %v155
    %v714 = vunpack.c.l.b16 %v156
    %v715 = vunpack.c.h.b16 %v156
    %v716 = vunpack.c.l.b16 %v157
    %v717 = vunpack.c.h.b16 %v157
    %v718 = vunpack.c.l.b16 %v158
    %v719 = vunpack.c.h.b16 %v158
    %v720 = vunpack.c.l.b16 %v159
    %v721 = vunpack.c.h.b16 %v159
    %v722 = vunpack.c.l.b16 %v160
    %v723 = vunpack.c.h.b16 %v160
    %v724 = vunpack.c.l.b16 %v161
    %v725 = vunpack.c.h.b16 %v161
    %v726 = vunpack.c.l.b16 %v162
    %v727 = vunpack.c.h.b16 %v162
    %v728 = vunpack.c.l.b16 %v163
    %v729 = vunpack.c.h.b16 %v163
    %v730 = vunpack.c.l.b16 %v164
    %v731 = vunpack.c.h.b16 %v164
    %v732 = vunpack.c.l.b16 %v165
    %v733 = vunpack.c.h.b16 %v165
    %v734 = vunpack.c.l.b16 %v166
    %v735 = vunpack.c.h.b16 %v166
    %v736 = vunpack.c.l.b16 %v167
    %v737 = vunpack.c.h.b16 %v167
    %v738 = vunpack.c.l.b16 %v168
    %v739 = vunpack.c.h.b16 %v168
    %v740 = vunpack.c.l.b16 %v169
    %v741 = vunpack.c.h.b16 %v169
    %v742 = vunpack.c.l.b16 %v170
    %v743 = vunpack.c.h.b16 %v170
    %v744 = vunpack.c.l.b16 %v171
    %v745 = vunpack.c.h.b16 %v171
    %v746 = vunpack.c.l.b16 %v172
    %v747 = vunpack.c.h.b16 %v172
    %v748 = vunpack.c.l.b16 %v173
    %v749 = vunpack.c.h.b16 %v173
    %v750 = vunpack.c.l.b16 %v174
    %v751 = vunpack.c.h.b16 %v174
    %v752 = vunpack.c.l.b16 %v175
    %v753 = vunpack.c.h.b16 %v175
    %v754 = vunpack.c.l.b16 %v176
    %v755 = vunpack.c.h.b16 %v176
    %v756 = vunpack.c.l.b16 %v177
    %v757 = vunpack.c.h.b16 %v177
    %v758 = vunpack.c.l.b16 %v178
    %v759 = vunpack.c.h.b16 %v178
    %v760 = vunpack.c.l.b16 %v179
    %v761 = vunpack.c.h.b16 %v179
    %v762 = vunpack.c.l.b16 %v180
    %v763 = vunpack.c.h.b16 %v180
    %v764 = vunpack.c.l.b16 %v181
    %v765 = vunpack.c.h.b16 %v181
    %v766 = vunpack.c.l.b16 %v182
    %v767 = vunpack.c.h.b16 %v182
    %v768 = vunpack.c.l.b16 %v183
    %v769 = vunpack.c.h.b16 %v183
    %v770 = vunpack.c.l.b16 %v184
    %v771 = vunpack.c.h.b16 %v184
    %v772 = vunpack.c.l.b16 %v185
    %v773 = vunpack.c.h.b16 %v185
    %v774 = vunpack.c.l.b16 %v186
    %v775 = vunpack.c.h.b16 %v186
    %v776 = vunpack.c.l.b16 %v187
    %v777 = vunpack.c.h.b16 %v187
    %v778 = vunpack.c.l.b16 %v188
    %v779 = vunpack.c.h.b16 %v188
    %v780 = vunpack.c.l.b16 %v189
    %v781 = vunpack.c.h.b16 %v189
    %v782 = vunpack.c.l.b16 %v190
    %v783 = vunpack.c.h.b16 %v190
    %v784 = vunpack.c.l.b16 %v191
    %v785 = vunpack.c.h.b16 %v191
    %v786 = vunpack.c.l.b16 %v192
    %v787 = vunpack.c.h.b16 %v192
    %v788 = vunpack.c.l.b16 %v193
    %v789 = vunpack.c.h.b16 %v193
    %v790 = vunpack.c.l.b16 %v194
    %v791 = vunpack.c.h.b16 %v194
    %v792 = vunpack.c.l.b16 %v195
    %v793 = vunpack.c.h.b16 %v195
    %v794 = vunpack.c.l.b16 %v196
    %v795 = vunpack.c.h.b16 %v196
    %v796 = vunpack.c.l.b16 %v197
    %v797 = vunpack.c.h.b16 %v197
    %v798 = vunpack.c.l.b16 %v198
    %v799 = vunpack.c.h.b16 %v198
    %v800 = vunpack.c.l.b16 %v199
    %v801 = vunpack.c.h.b16 %v199
    %v802 = vunpack.c.l.b16 %v200
    %v803 = vunpack.c.h.b16 %v200
    %v804 = vunpack.c.l.b16 %v201
    %v805 = vunpack.c.h.b16 %v201
    %v806 = vunpack.c.l.b16 %v202
    %v807 = vunpack.c.h.b16 %v202
    %v808 = vunpack.c.l.b16 %v203
    %v809 = vunpack.c.h.b16 %v203
    %v810 = vunpack.c.l.b16 %v204
    %v811 = vunpack.c.h.b16 %v204
    %v812 = vunpack.c.l.b16 %v205
    %v813 = vunpack.c.h.b16 %v205
    %v814 = vunpack.c.l.b16 %v206
    %v815 = vunpack.c.h.b16 %v206
    %v816 = vunpack.c.l.b16 %v207
    %v817 = vunpack.c.h.b16 %v207
    %v818 = vunpack.c.l.b16 %v208
    %v819 = vunpack.c.h.b16 %v208
    %v820 = vunpack.c.l.b16 %v209
    %v821 = vunpack.c.h.b16 %v209
    %v822 = vunpack.c.l.b16 %v210
    %v823 = vunpack.c.h.b16 %v210
    %v824 = vunpack.c.l.b16 %v211
    %v825 = vunpack.c.h.b16 %v211
    %v826 = vunpack.c.l.b16 %v212
    %v827 = vunpack.c.h.b16 %v212
    %v828 = vunpack.c.l.b16 %v213
    %v829 = vunpack.c.h.b16 %v213
    %v830 = vunpack.c.l.b16 %v214
    %v831 = vunpack.c.h.b16 %v214
    %v832 = vunpack.c.l.b16 %v215
    %v833 = vunpack.c.h.b16 %v215
    %v834 = vunpack.c.l.b16 %v216
    %v835 = vunpack.c.h.b16 %v216
    %v836 = vpack.c.b16 %v456, %v452
    %v837 = vpack.c.b16 %v457, %v453
    %v838 = vpack.c.b16 %v458, %v454
    %v839 = vpack.c.b16 %v459, %v455
    %v840 = vpack.c.b16 %v464, %v460
    %v841 = vpack.c.b16 %v465, %v461
    %v842 = vpack.c.b16 %v466, %v462
    %v843 = vpack.c.b16 %v467, %v463
    %v844 = vpack.c.b16 %v472, %v468
    %v845 = vpack.c.b16 %v473, %v469
    %v846 = vpack.c.b16 %v474, %v470
    %v847 = vpack.c.b16 %v475, %v471
    %v848 = vpack.c.b16 %v480, %v476
    %v849 = vpack.c.b16 %v481, %v477
    %v850 = vpack.c.b16 %v482, %v478
    %v851 = vpack.c.b16 %v483, %v479
    %v852 = vpack.c.b16 %v488, %v484
    %v853 = vpack.c.b16 %v489, %v485
    %v854 = vpack.c.b16 %v490, %v486
    %v855 = vpack.c.b16 %v491, %v487
    %v856 = vpack.c.b16 %v496, %v492
    %v857 = vpack.c.b16 %v497, %v493
    %v858 = vpack.c.b16 %v498, %v494
    %v859 = vpack.c.b16 %v499, %v495
    %v860 = vpack.c.b16 %v504, %v500
    %v861 = vpack.c.b16 %v505, %v501
    %v862 = vpack.c.b16 %v506, %v502
    %v863 = vpack.c.b16 %v507, %v503
    %v864 = vpack.c.b16 %v512, %v508
    %v865 = vpack.c.b16 %v513, %v509
    %v866 = vpack.c.b16 %v514, %v510
    %v867 = vpack.c.b16 %v515, %v511
    %v868 = vpack.c.b16 %v520, %v516
    %v869 = vpack.c.b16 %v521, %v517
    %v870 = vpack.c.b16 %v522, %v518
    %v871 = vpack.c.b16 %v523, %v519
    %v872 = vpack.c.b16 %v528, %v524
    %v873 = vpack.c.b16 %v529, %v525
    %v874 = vpack.c.b16 %v530, %v526
    %v875 = vpack.c.b16 %v531, %v527
    %v876 = vpack.c.b16 %v536, %v532
    %v877 = vpack.c.b16 %v537, %v533
    %v878 = vpack.c.b16 %v538, %v534
    %v879 = vpack.c.b16 %v539, %v535
    %v880 = vpack.c.b16 %v544, %v540
    %v881 = vpack.c.b16 %v545, %v541
    %v882 = vpack.c.b16 %v546, %v542
    %v883 = vpack.c.b16 %v547, %v543
    %v884 = vpack.c.b16 %v552, %v548
    %v885 = vpack.c.b16 %v553, %v549
    %v886 = vpack.c.b16 %v554, %v550
    %v887 = vpack.c.b16 %v555, %v551
    %v888 = vpack.c.b16 %v560, %v556
    %v889 = vpack.c.b16 %v561, %v557
    %v890 = vpack.c.b16 %v562, %v558
    %v891 = vpack.c.b16 %v563, %v559
    %v892 = vpack.c.b16 %v568, %v564
    %v893 = vpack.c.b16 %v569, %v565
    %v894 = vpack.c.b16 %v570, %v566
    %v895 = vpack.c.b16 %v571, %v567
    %v896 = vpack.c.b16 %v576, %v572
    %v897 = vpack.c.b16 %v577, %v573
    %v898 = vpack.c.b16 %v578, %v574
    %v899 = vpack.c.b16 %v579, %v575
    %v900 = vpack.c.b16 %v584, %v580
    %v901 = vpack.c.b16 %v585, %v581
    %v902 = vpack.c.b16 %v586, %v582
    %v903 = vpack.c.b16 %v587, %v583
    %v904 = vpack.c.b16 %v592, %v588
    %v905 = vpack.c.b16 %v593, %v589
    %v906 = vpack.c.b16 %v594, %v590
    %v907 = vpack.c.b16 %v595, %v591
    %v908 = vpack.c.b16 %v600, %v596
    %v909 = vpack.c.b16 %v601, %v597
    %v910 = vpack.c.b16 %v602, %v598
    %v911 = vpack.c.b16 %v603, %v599
    %v912 = vpack.c.b16 %v608, %v604
    %v913 = vpack.c.b16 %v609, %v605
    %v914 = vpack.c.b16 %v610, %v606
    %v915 = vpack.c.b16 %v611, %v607
    %v916 = vpack.c.b16 %v616, %v612
    %v917 = vpack.c.b16 %v617, %v613
    %v918 = vpack.c.b16 %v618, %v614
    %v919 = vpack.c.b16 %v619, %v615
    %v920 = vpack.c.b16 %v624, %v620
    %v921 = vpack.c.b16 %v625, %v621
    %v922 = vpack.c.b16 %v626, %v622
    %v923 = vpack.c.b16 %v627, %v623
    %v924 = vpack.c.b16 %v632, %v628
    %v925 = vpack.c.b16 %v633, %v629
    %v926 = vpack.c.b16 %v634, %v630
    %v927 = vpack.c.b16 %v635, %v631
    %v928 = vpack.c.b16 %v640, %v636
    %v929 = vpack.c.b16 %v641, %v637
    %v930 = vpack.c.b16 %v642, %v638
    %v931 = vpack.c.b16 %v643, %v639
    %v932 = vpack.c.b16 %v648, %v644
    %v933 = vpack.c.b16 %v649, %v645
    %v934 = vpack.c.b16 %v650, %v646
    %v935 = vpack.c.b16 %v651, %v647
    %v936 = vpack.c.b16 %v656, %v652
    %v937 = vpack.c.b16 %v657, %v653
    %v938 = vpack.c.b16 %v658, %v654
    %v939 = vpack.c.b16 %v659, %v655
    %v940 = vpack.c.b16 %v664, %v660
    %v941 = vpack.c.b16 %v665, %v661
    %v942 = vpack.c.b16 %v666, %v662
    %v943 = vpack.c.b16 %v667, %v663
    %v944 = vpack.c.b16 %v672, %v668
    %v945 = vpack.c.b16 %v673, %v669
    %v946 = vpack.c.b16 %v674, %v670
    %v947 = vpack.c.b16 %v675, %v671
    %v948 = vpack.c.b16 %v680, %v676
    %v949 = vpack.c.b16 %v681, %v677
    %v950 = vpack.c.b16 %v682, %v678
    %v951 = vpack.c.b16 %v683, %v679
    %v952 = vpack.c.b16 %v688, %v684
    %v953 = vpack.c.b16 %v689, %v685
    %v954 = vpack.c.b16 %v690, %v686
    %v955 = vpack.c.b16 %v691, %v687
    %v956 = vpack.c.b16 %v696, %v692
    %v957 = vpack.c.b16 %v697, %v693
    %v958 = vpack.c.b16 %v698, %v694
    %v959 = vpack.c.b16 %v699, %v695
    %v960 = vpack.c.b16 %v704, %v700
    %v961 = vpack.c.b16 %v705, %v701
    %v962 = vpack.c.b16 %v706, %v702
    %v963 = vpack.c.b16 %v707, %v703
    %v964 = vpack.c.b16 %v712, %v708
    %v965 = vpack.c.b16 %v713, %v709
    %v966 = vpack.c.b16 %v714, %v710
    %v967 = vpack.c.b16 %v715, %v711
    %v968 = vpack.c.b16 %v720, %v716
    %v969 = vpack.c.b16 %v721, %v717
    %v970 = vpack.c.b16 %v722, %v718
    %v971 = vpack.c.b16 %v723, %v719
    %v972 = vpack.c.b16 %v728, %v724
    %v973 = vpack.c.b16 %v729, %v725
    %v974 = vpack.c.b16 %v730, %v726
    %v975 = vpack.c.b16 %v731, %v727
    %v976 = vpack.c.b16 %v736, %v732
    %v977 = vpack.c.b16 %v737, %v733
    %v978 = vpack.c.b16 %v738, %v734
    %v979 = vpack.c.b16 %v739, %v735
    %v980 = vpack.c.b16 %v744, %v740
    %v981 = vpack.c.b16 %v745, %v741
    %v982 = vpack.c.b16 %v746, %v742
    %v983 = vpack.c.b16 %v747, %v743
    %v984 = vpack.c.b16 %v752, %v748
    %v985 = vpack.c.b16 %v753, %v749
    %v986 = vpack.c.b16 %v754, %v750
    %v987 = vpack.c.b16 %v755, %v751
    %v988 = vpack.c.b16 %v760, %v756
    %v989 = vpack.c.b16 %v761, %v757
    %v990 = vpack.c.b16 %v762, %v758
    %v991 = vpack.c.b16 %v763, %v759
    %v992 = vpack.c.b16 %v768, %v764
    %v993 = vpack.c.b16 %v769, %v765
    %v994 = vpack.c.b16 %v770, %v766
    %v995 = vpack.c.b16 %v771, %v767
    %v996 = vpack.c.b16 %v776, %v772
    %v997 = vpack.c.b16 %v777, %v773
    %v998 = vpack.c.b16 %v778, %v774
    %v999 = vpack.c.b16 %v779, %v775
    %v1000 = vpack.c.b16 %v784, %v780
    %v1001 = vpack.c.b16 %v785, %v781
    %v1002 = vpack.c.b16 %v786, %v782
    %v1003 = vpack.c.b16 %v787, %v783
    %v1004 = vpack.c.b16 %v792, %v788
    %v1005 = vpack.c.b16 %v793, %v789
    %v1006 = vpack.c.b16 %v794, %v790
    %v1007 = vpack.c.b16 %v795, %v791
    %v1008 = vpack.c.b16 %v800, %v796
    %v1009 = vpack.c.b16 %v801, %v797
    %v1010 = vpack.c.b16 %v802, %v798
    %v1011 = vpack.c.b16 %v803, %v799
    %v1012 = vpack.c.b16 %v808, %v804
    %v1013 = vpack.c.b16 %v809, %v805
    %v1014 = vpack.c.b16 %v810, %v806
    %v1015 = vpack.c.b16 %v811, %v807
    %v1016 = vpack.c.b16 %v816, %v812
    %v1017 = vpack.c.b16 %v817, %v813
    %v1018 = vpack.c.b16 %v818, %v814
    %v1019 = vpack.c.b16 %v819, %v815
    %v1020 = vpack.c.b16 %v824, %v820
    %v1021 = vpack.c.b16 %v825, %v821
    %v1022 = vpack.c.b16 %v826, %v822
    %v1023 = vpack.c.b16 %v827, %v823
    %v1024 = vpack.c.b16 %v832, %v828
    %v1025 = vpack.c.b16 %v833, %v829
    %v1026 = vpack.c.b16 %v834, %v830
    %v1027 = vpack.c.b16 %v835, %v831
    %1220 = vmatprep.subr.bf16.mxu0 %v865
    %1221 = vmatpush1.bf16.msra.mxu0 %v864
    %1222 = vmatprep.subr.bf16.mxu0 %v861
    %1223 = vmatpush1.bf16.msra.mxu0 %v860
    %1224 = vmatprep.subr.bf16.mxu0 %v857
    %1225 = vmatpush1.bf16.msra.mxu0 %v856
    %1226 = vmatprep.subr.bf16.mxu0 %v853
    %1227 = vmatpush1.bf16.msra.mxu0 %v852
    %1228 = vmatprep.subr.bf16.mxu0 %v849
    %1229 = vmatpush1.bf16.msra.mxu0 %v848
    %1230 = vmatprep.subr.bf16.mxu0 %v845
    %1231 = vmatpush1.bf16.msra.mxu0 %v844
    %1232 = vmatprep.subr.bf16.mxu0 %v841
    %1233 = vmatpush1.bf16.msra.mxu0 %v840
    %1234 = vmatprep.subr.bf16.mxu0 %v837
    %1235 = vmatpush1.bf16.msra.mxu0 %v836
    %1236 = vmatprep.subr.bf16.mxu0 %v897
    %1237 = vmatpush2.bf16.msra.mxu0 %v896
    %1238 = vmatprep.subr.bf16.mxu0 %v893
    %1239 = vmatpush2.bf16.msra.mxu0 %v892
    %1240 = vmatprep.subr.bf16.mxu0 %v889
    %1241 = vmatpush2.bf16.msra.mxu0 %v888
    %1242 = vmatprep.subr.bf16.mxu0 %v885
    %1243 = vmatpush2.bf16.msra.mxu0 %v884
    %1244 = vmatprep.subr.bf16.mxu0 %v881
    %1245 = vmatpush2.bf16.msra.mxu0 %v880
    %1246 = vmatprep.subr.bf16.mxu0 %v877
    %1247 = vmatpush2.bf16.msra.mxu0 %v876
    %1248 = vmatprep.subr.bf16.mxu0 %v873
    %1249 = vmatpush2.bf16.msra.mxu0 %v872
    %1250 = vmatprep.subr.bf16.mxu0 %v869
    %1251 = vmatpush2.bf16.msra.mxu0 %v868
    %1252 = vmatprep.mubr.bf16.mxu0 %v249
    %1253 = vmatmul.mubr.bf16.gmra.mxu0 %v248
    %v1254 = vpop.f32.mrf.mxu0
    %v1255 = vadd.f32 %v222, %v1254
    %v1256 = vpop.f32.mrf.mxu0
    %v1257 = vadd.f32 %v226, %v1256
    %v1258 = vpop.f32.mrf.mxu0
    %v1259 = vpop.f32.mrf.mxu0
    %1260 = vdwg.mxu0
    %1261 = vmatprep.subr.bf16.mxu0 %v929
    %1262 = vmatpush1.bf16.msra.mxu0 %v928
    %1263 = vmatprep.subr.bf16.mxu0 %v925
    %1264 = vmatpush1.bf16.msra.mxu0 %v924
    %1265 = vmatprep.subr.bf16.mxu0 %v921
    %1266 = vmatpush1.bf16.msra.mxu0 %v920
    %1267 = vmatprep.subr.bf16.mxu0 %v917
    %1268 = vmatpush1.bf16.msra.mxu0 %v916
    %1269 = vmatprep.subr.bf16.mxu0 %v913
    %1270 = vmatpush1.bf16.msra.mxu0 %v912
    %1271 = vmatprep.subr.bf16.mxu0 %v909
    %1272 = vmatpush1.bf16.msra.mxu0 %v908
    %1273 = vmatprep.subr.bf16.mxu0 %v905
    %1274 = vmatpush1.bf16.msra.mxu0 %v904
    %1275 = vmatprep.subr.bf16.mxu0 %v901
    %1276 = vmatpush1.bf16.msra.mxu0 %v900
    %1277 = vmatprep.subr.bf16.mxu0 %v961
    %1278 = vmatpush2.bf16.msra.mxu0 %v960
    %1279 = vmatprep.subr.bf16.mxu0 %v957
    %1280 = vmatpush2.bf16.msra.mxu0 %v956
    %1281 = vmatprep.subr.bf16.mxu0 %v953
    %1282 = vmatpush2.bf16.msra.mxu0 %v952
    %1283 = vmatprep.subr.bf16.mxu0 %v949
    %1284 = vmatpush2.bf16.msra.mxu0 %v948
    %1285 = vmatprep.subr.bf16.mxu0 %v945
    %1286 = vmatpush2.bf16.msra.mxu0 %v944
    %1287 = vmatprep.subr.bf16.mxu0 %v941
    %1288 = vmatpush2.bf16.msra.mxu0 %v940
    %1289 = vmatprep.subr.bf16.mxu0 %v937
    %1290 = vmatpush2.bf16.msra.mxu0 %v936
    %1291 = vmatprep.subr.bf16.mxu0 %v933
    %1292 = vmatpush2.bf16.msra.mxu0 %v932
    %1293 = vmatprep.mubr.bf16.mxu0 %v251
    %1294 = vmatmul.mubr.bf16.gmra.mxu0 %v250
    %v1295 = vpop.f32.mrf.mxu0
    %v1296 = vadd.f32 %v1255, %v1295
    %v1297 = vpop.f32.mrf.mxu0
    %v1298 = vadd.f32 %v1257, %v1297
    %v1299 = vpop.f32.mrf.mxu0
    %v1300 = vpop.f32.mrf.mxu0
    %1301 = vdwg.mxu0
    %1302 = vmatprep.subr.bf16.mxu0 %v993
    %1303 = vmatpush1.bf16.msra.mxu0 %v992
    %1304 = vmatprep.subr.bf16.mxu0 %v989
    %1305 = vmatpush1.bf16.msra.mxu0 %v988
    %1306 = vmatprep.subr.bf16.mxu0 %v985
    %1307 = vmatpush1.bf16.msra.mxu0 %v984
    %1308 = vmatprep.subr.bf16.mxu0 %v981
    %1309 = vmatpush1.bf16.msra.mxu0 %v980
    %1310 = vmatprep.subr.bf16.mxu0 %v977
    %1311 = vmatpush1.bf16.msra.mxu0 %v976
    %1312 = vmatprep.subr.bf16.mxu0 %v973
    %1313 = vmatpush1.bf16.msra.mxu0 %v972
    %1314 = vmatprep.subr.bf16.mxu0 %v969
    %1315 = vmatpush1.bf16.msra.mxu0 %v968
    %1316 = vmatprep.subr.bf16.mxu0 %v965
    %1317 = vmatpush1.bf16.msra.mxu0 %v964
    %1318 = vmatprep.subr.bf16.mxu0 %v1025
    %1319 = vmatpush2.bf16.msra.mxu0 %v1024
    %1320 = vmatprep.subr.bf16.mxu0 %v1021
    %1321 = vmatpush2.bf16.msra.mxu0 %v1020
    %1322 = vmatprep.subr.bf16.mxu0 %v1017
    %1323 = vmatpush2.bf16.msra.mxu0 %v1016
    %1324 = vmatprep.subr.bf16.mxu0 %v1013
    %1325 = vmatpush2.bf16.msra.mxu0 %v1012
    %1326 = vmatprep.subr.bf16.mxu0 %v1009
    %1327 = vmatpush2.bf16.msra.mxu0 %v1008
    %1328 = vmatprep.subr.bf16.mxu0 %v1005
    %1329 = vmatpush2.bf16.msra.mxu0 %v1004
    %1330 = vmatprep.subr.bf16.mxu0 %v1001
    %1331 = vmatpush2.bf16.msra.mxu0 %v1000
    %1332 = vmatprep.subr.bf16.mxu0 %v997
    %1333 = vmatpush2.bf16.msra.mxu0 %v996
    %1334 = vmatprep.mubr.bf16.mxu0 %v253
    %1335 = vmatmul.mubr.bf16.gmra.mxu0 %v252
    %v1336 = vpop.f32.mrf.mxu0
    %v1337 = vadd.f32 %v1296, %v1336
    %v1338 = vpop.f32.mrf.mxu0
    %v1339 = vadd.f32 %v1298, %v1338
    %v1340 = vpop.f32.mrf.mxu0
    %v1341 = vpop.f32.mrf.mxu0
    %1342 = vdwg.mxu0
    %1343 = vmatprep.subr.bf16.mxu0 %v867
    %1344 = vmatpush1.bf16.msra.mxu0 %v866
    %1345 = vmatprep.subr.bf16.mxu0 %v863
    %1346 = vmatpush1.bf16.msra.mxu0 %v862
    %1347 = vmatprep.subr.bf16.mxu0 %v859
    %1348 = vmatpush1.bf16.msra.mxu0 %v858
    %1349 = vmatprep.subr.bf16.mxu0 %v855
    %1350 = vmatpush1.bf16.msra.mxu0 %v854
    %1351 = vmatprep.subr.bf16.mxu0 %v851
    %1352 = vmatpush1.bf16.msra.mxu0 %v850
    %1353 = vmatprep.subr.bf16.mxu0 %v847
    %1354 = vmatpush1.bf16.msra.mxu0 %v846
    %1355 = vmatprep.subr.bf16.mxu0 %v843
    %1356 = vmatpush1.bf16.msra.mxu0 %v842
    %1357 = vmatprep.subr.bf16.mxu0 %v839
    %1358 = vmatpush1.bf16.msra.mxu0 %v838
    %1359 = vmatprep.subr.bf16.mxu0 %v899
    %1360 = vmatpush2.bf16.msra.mxu0 %v898
    %1361 = vmatprep.subr.bf16.mxu0 %v895
    %1362 = vmatpush2.bf16.msra.mxu0 %v894
    %1363 = vmatprep.subr.bf16.mxu0 %v891
    %1364 = vmatpush2.bf16.msra.mxu0 %v890
    %1365 = vmatprep.subr.bf16.mxu0 %v887
    %1366 = vmatpush2.bf16.msra.mxu0 %v886
    %1367 = vmatprep.subr.bf16.mxu0 %v883
    %1368 = vmatpush2.bf16.msra.mxu0 %v882
    %1369 = vmatprep.subr.bf16.mxu0 %v879
    %1370 = vmatpush2.bf16.msra.mxu0 %v878
    %1371 = vmatprep.subr.bf16.mxu0 %v875
    %1372 = vmatpush2.bf16.msra.mxu0 %v874
    %1373 = vmatprep.subr.bf16.mxu0 %v871
    %1374 = vmatpush2.bf16.msra.mxu0 %v870
    %1375 = vmatprep.mubr.bf16.mxu0 %v249
    %1376 = vmatmul.mubr.bf16.gmra.mxu0 %v248
    %v1377 = vpop.f32.mrf.mxu0
    %v1378 = vadd.f32 %v230, %v1377
    %v1379 = vpop.f32.mrf.mxu0
    %v1380 = vadd.f32 %v234, %v1379
    %v1381 = vpop.f32.mrf.mxu0
    %v1382 = vpop.f32.mrf.mxu0
    %1383 = vdwg.mxu0
    %1384 = vmatprep.subr.bf16.mxu0 %v931
    %1385 = vmatpush1.bf16.msra.mxu0 %v930
    %1386 = vmatprep.subr.bf16.mxu0 %v927
    %1387 = vmatpush1.bf16.msra.mxu0 %v926
    %1388 = vmatprep.subr.bf16.mxu0 %v923
    %1389 = vmatpush1.bf16.msra.mxu0 %v922
    %1390 = vmatprep.subr.bf16.mxu0 %v919
    %1391 = vmatpush1.bf16.msra.mxu0 %v918
    %1392 = vmatprep.subr.bf16.mxu0 %v915
    %1393 = vmatpush1.bf16.msra.mxu0 %v914
    %1394 = vmatprep.subr.bf16.mxu0 %v911
    %1395 = vmatpush1.bf16.msra.mxu0 %v910
    %1396 = vmatprep.subr.bf16.mxu0 %v907
    %1397 = vmatpush1.bf16.msra.mxu0 %v906
    %1398 = vmatprep.subr.bf16.mxu0 %v903
    %1399 = vmatpush1.bf16.msra.mxu0 %v902
    %1400 = vmatprep.subr.bf16.mxu0 %v963
    %1401 = vmatpush2.bf16.msra.mxu0 %v962
    %1402 = vmatprep.subr.bf16.mxu0 %v959
    %1403 = vmatpush2.bf16.msra.mxu0 %v958
    %1404 = vmatprep.subr.bf16.mxu0 %v955
    %1405 = vmatpush2.bf16.msra.mxu0 %v954
    %1406 = vmatprep.subr.bf16.mxu0 %v951
    %1407 = vmatpush2.bf16.msra.mxu0 %v950
    %1408 = vmatprep.subr.bf16.mxu0 %v947
    %1409 = vmatpush2.bf16.msra.mxu0 %v946
    %1410 = vmatprep.subr.bf16.mxu0 %v943
    %1411 = vmatpush2.bf16.msra.mxu0 %v942
    %1412 = vmatprep.subr.bf16.mxu0 %v939
    %1413 = vmatpush2.bf16.msra.mxu0 %v938
    %1414 = vmatprep.subr.bf16.mxu0 %v935
    %1415 = vmatpush2.bf16.msra.mxu0 %v934
    %1416 = vmatprep.mubr.bf16.mxu0 %v251
    %1417 = vmatmul.mubr.bf16.gmra.mxu0 %v250
    %v1418 = vpop.f32.mrf.mxu0
    %v1419 = vadd.f32 %v1378, %v1418
    %v1420 = vpop.f32.mrf.mxu0
    %v1421 = vadd.f32 %v1380, %v1420
    %v1422 = vpop.f32.mrf.mxu0
    %v1423 = vpop.f32.mrf.mxu0
    %1424 = vdwg.mxu0
    %1425 = vmatprep.subr.bf16.mxu0 %v995
    %1426 = vmatpush1.bf16.msra.mxu0 %v994
    %1427 = vmatprep.subr.bf16.mxu0 %v991
    %1428 = vmatpush1.bf16.msra.mxu0 %v990
    %1429 = vmatprep.subr.bf16.mxu0 %v987
    %1430 = vmatpush1.bf16.msra.mxu0 %v986
    %1431 = vmatprep.subr.bf16.mxu0 %v983
    %1432 = vmatpush1.bf16.msra.mxu0 %v982
    %1433 = vmatprep.subr.bf16.mxu0 %v979
    %1434 = vmatpush1.bf16.msra.mxu0 %v978
    %1435 = vmatprep.subr.bf16.mxu0 %v975
    %1436 = vmatpush1.bf16.msra.mxu0 %v974
    %1437 = vmatprep.subr.bf16.mxu0 %v971
    %1438 = vmatpush1.bf16.msra.mxu0 %v970
    %1439 = vmatprep.subr.bf16.mxu0 %v967
    %1440 = vmatpush1.bf16.msra.mxu0 %v966
    %1441 = vmatprep.subr.bf16.mxu0 %v1027
    %1442 = vmatpush2.bf16.msra.mxu0 %v1026
    %1443 = vmatprep.subr.bf16.mxu0 %v1023
    %1444 = vmatpush2.bf16.msra.mxu0 %v1022
    %1445 = vmatprep.subr.bf16.mxu0 %v1019
    %1446 = vmatpush2.bf16.msra.mxu0 %v1018
    %1447 = vmatprep.subr.bf16.mxu0 %v1015
    %1448 = vmatpush2.bf16.msra.mxu0 %v1014
    %1449 = vmatprep.subr.bf16.mxu0 %v1011
    %1450 = vmatpush2.bf16.msra.mxu0 %v1010
    %1451 = vmatprep.subr.bf16.mxu0 %v1007
    %1452 = vmatpush2.bf16.msra.mxu0 %v1006
    %1453 = vmatprep.subr.bf16.mxu0 %v1003
    %1454 = vmatpush2.bf16.msra.mxu0 %v1002
    %1455 = vmatprep.subr.bf16.mxu0 %v999
    %1456 = vmatpush2.bf16.msra.mxu0 %v998
    %1457 = vmatprep.mubr.bf16.mxu0 %v253
    %1458 = vmatmul.mubr.bf16.gmra.mxu0 %v252
    %v1459 = vpop.f32.mrf.mxu0
    %v1460 = vadd.f32 %v1419, %v1459
    %v1461 = vpop.f32.mrf.mxu0
    %v1462 = vadd.f32 %v1421, %v1461
    %v1463 = vpop.f32.mrf.mxu0
    %v1464 = vpop.f32.mrf.mxu0
    %1465 = vdwg.mxu0
    %v1466 = vmax.f32 %v1337, 0.0
    %v1467 = vmax.f32 %v1339, 0.0
    %v1468 = vmax.f32 %v1460, 0.0
    %v1469 = vmax.f32 %v1462, 0.0
    %v1470 = vpack.c.bf16 %v1466, %v1466
    %v1471 = vpack.c.bf16 %v1467, %v1467
    %v1472 = vpack.c.bf16 %v1468, %v1468
    %v1473 = vpack.c.bf16 %v1469, %v1469
    %v1474 = vld [vmem:[%s3] sm:$0xf]
    %v1475 = vld [vmem:[%s3 + $0x4] sm:$0xf]
    %v1476 = vld [vmem:[%s3 + $0x8] sm:$0xf]
    %v1477 = vld [vmem:[%s3 + $0xc] sm:$0xf]
    %v1478 = vld [vmem:[%s3 + $0x10] sm:$0xf]
    %v1479 = vld [vmem:[%s3 + $0x14] sm:$0xf]
    %v1480 = vld [vmem:[%s3 + $0x18] sm:$0xf]
    %v1481 = vld [vmem:[%s3 + $0x1c] sm:$0xf]
    %v1482 = vld [vmem:[%s3 + $0x20] sm:$0xf]
    %v1483 = vld [vmem:[%s3 + $0x24] sm:$0xf]
    %v1484 = vld [vmem:[%s3 + $0x28] sm:$0xf]
    %v1485 = vld [vmem:[%s3 + $0x2c] sm:$0xf]
    %v1486 = vld [vmem:[%s3 + $0x30] sm:$0xf]
    %v1487 = vld [vmem:[%s3 + $0x34] sm:$0xf]
    %v1488 = vld [vmem:[%s3 + $0x38] sm:$0xf]
    %v1489 = vld [vmem:[%s3 + $0x3c] sm:$0xf]
    %v1490 = vld [vmem:[%s3 + $0x40] sm:$0xf]
    %v1491 = vld [vmem:[%s3 + $0x44] sm:$0xf]
    %v1492 = vld [vmem:[%s3 + $0x48] sm:$0xf]
    %v1493 = vld [vmem:[%s3 + $0x4c] sm:$0xf]
    %v1494 = vld [vmem:[%s3 + $0x50] sm:$0xf]
    %v1495 = vld [vmem:[%s3 + $0x54] sm:$0xf]
    %v1496 = vld [vmem:[%s3 + $0x58] sm:$0xf]
    %v1497 = vld [vmem:[%s3 + $0x5c] sm:$0xf]
    %v1498 = vld [vmem:[%s3 + $0x60] sm:$0xf]
    %v1499 = vld [vmem:[%s3 + $0x64] sm:$0xf]
    %v1500 = vld [vmem:[%s3 + $0x68] sm:$0xf]
    %v1501 = vld [vmem:[%s3 + $0x6c] sm:$0xf]
    %v1502 = vld [vmem:[%s3 + $0x70] sm:$0xf]
    %v1503 = vld [vmem:[%s3 + $0x74] sm:$0xf]
    %v1504 = vld [vmem:[%s3 + $0x78] sm:$0xf]
    %v1505 = vld [vmem:[%s3 + $0x7c] sm:$0xf]
    %v1506 = vld [vmem:[%s3 + $0x80] sm:$0xf]
    %v1507 = vld [vmem:[%s3 + $0x84] sm:$0xf]
    %v1508 = vld [vmem:[%s3 + $0x88] sm:$0xf]
    %v1509 = vld [vmem:[%s3 + $0x8c] sm:$0xf]
    %v1510 = vld [vmem:[%s3 + $0x90] sm:$0xf]
    %v1511 = vld [vmem:[%s3 + $0x94] sm:$0xf]
    %v1512 = vld [vmem:[%s3 + $0x98] sm:$0xf]
    %v1513 = vld [vmem:[%s3 + $0x9c] sm:$0xf]
    %v1514 = vld [vmem:[%s3 + $0xa0] sm:$0xf]
    %v1515 = vld [vmem:[%s3 + $0xa4] sm:$0xf]
    %v1516 = vld [vmem:[%s3 + $0xa8] sm:$0xf]
    %v1517 = vld [vmem:[%s3 + $0xac] sm:$0xf]
    %v1518 = vld [vmem:[%s3 + $0xb0] sm:$0xf]
    %v1519 = vld [vmem:[%s3 + $0xb4] sm:$0xf]
    %v1520 = vld [vmem:[%s3 + $0xb8] sm:$0xf]
    %v1521 = vld [vmem:[%s3 + $0xbc] sm:$0xf]
    %v1522 = vld [vmem:[%s3 + $0xc0] sm:$0xf]
    %v1523 = vld [vmem:[%s3 + $0xc4] sm:$0xf]
    %v1524 = vld [vmem:[%s3 + $0xc8] sm:$0xf]
    %v1525 = vld [vmem:[%s3 + $0xcc] sm:$0xf]
    %v1526 = vld [vmem:[%s3 + $0xd0] sm:$0xf]
    %v1527 = vld [vmem:[%s3 + $0xd4] sm:$0xf]
    %v1528 = vld [vmem:[%s3 + $0xd8] sm:$0xf]
    %v1529 = vld [vmem:[%s3 + $0xdc] sm:$0xf]
    %v1530 = vld [vmem:[%s3 + $0xe0] sm:$0xf]
    %v1531 = vld [vmem:[%s3 + $0xe4] sm:$0xf]
    %v1532 = vld [vmem:[%s3 + $0xe8] sm:$0xf]
    %v1533 = vld [vmem:[%s3 + $0xec] sm:$0xf]
    %v1534 = vld [vmem:[%s3 + $0xf0] sm:$0xf]
    %v1535 = vld [vmem:[%s3 + $0xf4] sm:$0xf]
    %v1536 = vld [vmem:[%s3 + $0xf8] sm:$0xf]
    %v1537 = vld [vmem:[%s3 + $0xfc] sm:$0xf]
    %v1538 = vld [vmem:[%s4] sm:$0x1]
    %v1540 = vlaneseq
    %v1541 = vshrl.u32 %v1540, 7
    %v1542 = vsub.s32 0, %v1541
    %v1543 = vrot.slane %v1538, %v1542
    %v1609 = vunpack.c.l.b16 %v1474
    %v1610 = vunpack.c.l.b16 %v1475
    %v1611 = vunpack.c.l.b16 %v1476
    %v1612 = vunpack.c.l.b16 %v1477
    %v1613 = vunpack.c.l.b16 %v1478
    %v1614 = vunpack.c.l.b16 %v1479
    %v1615 = vunpack.c.l.b16 %v1480
    %v1616 = vunpack.c.l.b16 %v1481
    %v1617 = vunpack.c.l.b16 %v1482
    %v1618 = vunpack.c.l.b16 %v1483
    %v1619 = vunpack.c.l.b16 %v1484
    %v1620 = vunpack.c.l.b16 %v1485
    %v1621 = vunpack.c.l.b16 %v1486
    %v1622 = vunpack.c.l.b16 %v1487
    %v1623 = vunpack.c.l.b16 %v1488
    %v1624 = vunpack.c.l.b16 %v1489
    %v1625 = vunpack.c.l.b16 %v1490
    %v1626 = vunpack.c.l.b16 %v1491
    %v1627 = vunpack.c.l.b16 %v1492
    %v1628 = vunpack.c.l.b16 %v1493
    %v1629 = vunpack.c.l.b16 %v1494
    %v1630 = vunpack.c.l.b16 %v1495
    %v1631 = vunpack.c.l.b16 %v1496
    %v1632 = vunpack.c.l.b16 %v1497
    %v1633 = vunpack.c.l.b16 %v1498
    %v1634 = vunpack.c.l.b16 %v1499
    %v1635 = vunpack.c.l.b16 %v1500
    %v1636 = vunpack.c.l.b16 %v1501
    %v1637 = vunpack.c.l.b16 %v1502
    %v1638 = vunpack.c.l.b16 %v1503
    %v1639 = vunpack.c.l.b16 %v1504
    %v1640 = vunpack.c.l.b16 %v1505
    %v1641 = vunpack.c.l.b16 %v1506
    %v1642 = vunpack.c.l.b16 %v1507
    %v1643 = vunpack.c.l.b16 %v1508
    %v1644 = vunpack.c.l.b16 %v1509
    %v1645 = vunpack.c.l.b16 %v1510
    %v1646 = vunpack.c.l.b16 %v1511
    %v1647 = vunpack.c.l.b16 %v1512
    %v1648 = vunpack.c.l.b16 %v1513
    %v1649 = vunpack.c.l.b16 %v1514
    %v1650 = vunpack.c.l.b16 %v1515
    %v1651 = vunpack.c.l.b16 %v1516
    %v1652 = vunpack.c.l.b16 %v1517
    %v1653 = vunpack.c.l.b16 %v1518
    %v1654 = vunpack.c.l.b16 %v1519
    %v1655 = vunpack.c.l.b16 %v1520
    %v1656 = vunpack.c.l.b16 %v1521
    %v1657 = vunpack.c.l.b16 %v1522
    %v1658 = vunpack.c.l.b16 %v1523
    %v1659 = vunpack.c.l.b16 %v1524
    %v1660 = vunpack.c.l.b16 %v1525
    %v1661 = vunpack.c.l.b16 %v1526
    %v1662 = vunpack.c.l.b16 %v1527
    %v1663 = vunpack.c.l.b16 %v1528
    %v1664 = vunpack.c.l.b16 %v1529
    %v1665 = vunpack.c.l.b16 %v1530
    %v1666 = vunpack.c.l.b16 %v1531
    %v1667 = vunpack.c.l.b16 %v1532
    %v1668 = vunpack.c.l.b16 %v1533
    %v1669 = vunpack.c.l.b16 %v1534
    %v1670 = vunpack.c.l.b16 %v1535
    %v1671 = vunpack.c.l.b16 %v1536
    %v1672 = vunpack.c.l.b16 %v1537
    %v1673 = vpack.c.b16 %v1610, %v1609
    %v1674 = vpack.c.b16 %v1612, %v1611
    %v1675 = vpack.c.b16 %v1614, %v1613
    %v1676 = vpack.c.b16 %v1616, %v1615
    %v1677 = vpack.c.b16 %v1618, %v1617
    %v1678 = vpack.c.b16 %v1620, %v1619
    %v1679 = vpack.c.b16 %v1622, %v1621
    %v1680 = vpack.c.b16 %v1624, %v1623
    %v1681 = vpack.c.b16 %v1626, %v1625
    %v1682 = vpack.c.b16 %v1628, %v1627
    %v1683 = vpack.c.b16 %v1630, %v1629
    %v1684 = vpack.c.b16 %v1632, %v1631
    %v1685 = vpack.c.b16 %v1634, %v1633
    %v1686 = vpack.c.b16 %v1636, %v1635
    %v1687 = vpack.c.b16 %v1638, %v1637
    %v1688 = vpack.c.b16 %v1640, %v1639
    %v1689 = vpack.c.b16 %v1642, %v1641
    %v1690 = vpack.c.b16 %v1644, %v1643
    %v1691 = vpack.c.b16 %v1646, %v1645
    %v1692 = vpack.c.b16 %v1648, %v1647
    %v1693 = vpack.c.b16 %v1650, %v1649
    %v1694 = vpack.c.b16 %v1652, %v1651
    %v1695 = vpack.c.b16 %v1654, %v1653
    %v1696 = vpack.c.b16 %v1656, %v1655
    %v1697 = vpack.c.b16 %v1658, %v1657
    %v1698 = vpack.c.b16 %v1660, %v1659
    %v1699 = vpack.c.b16 %v1662, %v1661
    %v1700 = vpack.c.b16 %v1664, %v1663
    %v1701 = vpack.c.b16 %v1666, %v1665
    %v1702 = vpack.c.b16 %v1668, %v1667
    %v1703 = vpack.c.b16 %v1670, %v1669
    %v1704 = vpack.c.b16 %v1672, %v1671
    %1737 = vmatprep.subr.bf16.mxu0 0
    %1738 = vmatpush1.bf16.msra.mxu0 %v1680
    %1739 = vmatprep.subr.bf16.mxu0 0
    %1740 = vmatpush1.bf16.msra.mxu0 %v1679
    %1741 = vmatprep.subr.bf16.mxu0 0
    %1742 = vmatpush1.bf16.msra.mxu0 %v1678
    %1743 = vmatprep.subr.bf16.mxu0 0
    %1744 = vmatpush1.bf16.msra.mxu0 %v1677
    %1745 = vmatprep.subr.bf16.mxu0 0
    %1746 = vmatpush1.bf16.msra.mxu0 %v1676
    %1747 = vmatprep.subr.bf16.mxu0 0
    %1748 = vmatpush1.bf16.msra.mxu0 %v1675
    %1749 = vmatprep.subr.bf16.mxu0 0
    %1750 = vmatpush1.bf16.msra.mxu0 %v1674
    %1751 = vmatprep.subr.bf16.mxu0 0
    %1752 = vmatpush1.bf16.msra.mxu0 %v1673
    %1753 = vmatprep.subr.bf16.mxu0 0
    %1754 = vmatpush2.bf16.msra.mxu0 %v1688
    %1755 = vmatprep.subr.bf16.mxu0 0
    %1756 = vmatpush2.bf16.msra.mxu0 %v1687
    %1757 = vmatprep.subr.bf16.mxu0 0
    %1758 = vmatpush2.bf16.msra.mxu0 %v1686
    %1759 = vmatprep.subr.bf16.mxu0 0
    %1760 = vmatpush2.bf16.msra.mxu0 %v1685
    %1761 = vmatprep.subr.bf16.mxu0 0
    %1762 = vmatpush2.bf16.msra.mxu0 %v1684
    %1763 = vmatprep.subr.bf16.mxu0 0
    %1764 = vmatpush2.bf16.msra.mxu0 %v1683
    %1765 = vmatprep.subr.bf16.mxu0 0
    %1766 = vmatpush2.bf16.msra.mxu0 %v1682
    %1767 = vmatprep.subr.bf16.mxu0 0
    %1768 = vmatpush2.bf16.msra.mxu0 %v1681
    %1769 = vmatprep.mubr.bf16.mxu0 %v1471
    %1770 = vmatmul.mubr.bf16.gmra.mxu0 %v1470
    %v1771 = vpop.f32.mrf.mxu0
    %v1772 = vadd.f32 %v1543, %v1771
    %v1773 = vpop.f32.mrf.mxu0
    %v1774 = vpop.f32.mrf.mxu0
    %v1775 = vpop.f32.mrf.mxu0
    %1776 = vdwg.mxu0
    %1777 = vmatprep.subr.bf16.mxu0 0
    %1778 = vmatpush1.bf16.msra.mxu0 %v1696
    %1779 = vmatprep.subr.bf16.mxu0 0
    %1780 = vmatpush1.bf16.msra.mxu0 %v1695
    %1781 = vmatprep.subr.bf16.mxu0 0
    %1782 = vmatpush1.bf16.msra.mxu0 %v1694
    %1783 = vmatprep.subr.bf16.mxu0 0
    %1784 = vmatpush1.bf16.msra.mxu0 %v1693
    %1785 = vmatprep.subr.bf16.mxu0 0
    %1786 = vmatpush1.bf16.msra.mxu0 %v1692
    %1787 = vmatprep.subr.bf16.mxu0 0
    %1788 = vmatpush1.bf16.msra.mxu0 %v1691
    %1789 = vmatprep.subr.bf16.mxu0 0
    %1790 = vmatpush1.bf16.msra.mxu0 %v1690
    %1791 = vmatprep.subr.bf16.mxu0 0
    %1792 = vmatpush1.bf16.msra.mxu0 %v1689
    %1793 = vmatprep.subr.bf16.mxu0 0
    %1794 = vmatpush2.bf16.msra.mxu0 %v1704
    %1795 = vmatprep.subr.bf16.mxu0 0
    %1796 = vmatpush2.bf16.msra.mxu0 %v1703
    %1797 = vmatprep.subr.bf16.mxu0 0
    %1798 = vmatpush2.bf16.msra.mxu0 %v1702
    %1799 = vmatprep.subr.bf16.mxu0 0
    %1800 = vmatpush2.bf16.msra.mxu0 %v1701
    %1801 = vmatprep.subr.bf16.mxu0 0
    %1802 = vmatpush2.bf16.msra.mxu0 %v1700
    %1803 = vmatprep.subr.bf16.mxu0 0
    %1804 = vmatpush2.bf16.msra.mxu0 %v1699
    %1805 = vmatprep.subr.bf16.mxu0 0
    %1806 = vmatpush2.bf16.msra.mxu0 %v1698
    %1807 = vmatprep.subr.bf16.mxu0 0
    %1808 = vmatpush2.bf16.msra.mxu0 %v1697
    %1809 = vmatprep.mubr.bf16.mxu0 %v1473
    %1810 = vmatmul.mubr.bf16.gmra.mxu0 %v1472
    %v1811 = vpop.f32.mrf.mxu0
    %v1812 = vadd.f32 %v1772, %v1811
    %v1813 = vpop.f32.mrf.mxu0
    %v1814 = vpop.f32.mrf.mxu0
    %v1815 = vpop.f32.mrf.mxu0
    %1816 = vdwg.mxu0
    %1817 = vst [vmem:[#allocation2] sm:$0xff] %v1812
    // Predicated region
    $region22: #{side_effect_predictor.1} parent=1 // pred_check
      _
    $region23: #{side_effect_predictor.1} parent=1 // pred_check_branch
      %1819 = sbr.rel (0) target = $region25
    $region24: #{side_effect_predictor.1} parent=1 // pred_region
      %s1821 = ssub.s32 128, 128
      %1822 = vsyncadd [#allocation3], %s1821
      %s1824 = sshll.u32 [#allocation2], 4
      %s1825 = int_to_ptr.vmem [resolvable:$true] %s1824
      %1827 = dma.vmem_to_hbm [thread:$0]  %s1825, 128, %s5, [#allocation3]
    $region25: #{side_effect_predictor.1} parent=1 // pred_fallthru
      _
    // Predicated region
    $region26: #{side_effect_predictor.1} parent=1 // pred_check
      _
    $region27: #{side_effect_predictor.1} parent=1 // pred_check_branch
      %1829 = sbr.rel (0) target = $region29
    $region28: #{side_effect_predictor.1} parent=1 // pred_region
      %1830 = dma.done [#allocation3], 128
    $region29: #{side_effect_predictor.1} parent=1 // pred_fallthru
      _
    %1831 = vsyncpa [#allocation3], 1

</llo_original>
